<compile_context>
chip_gen: v5e
topology: v5e:2x2
jax: 0.10.0
libtpu: 0.0.40
codegen_flags: <defaults>
</compile_context>

<pallas_src>
import functools

import jax
import jax.numpy as jnp
from jax.experimental import pallas as pl
from jax.experimental.pallas import tpu as pltpu

LANES = 128
MAX_TILE_ROWS = 2048      # (2048, 128) f32 block = 1 MiB; well under scoped VMEM on all gens
NUM_CORE_SPLITS = 2       # leading "parallel" grid axis (megacore sharding on v7x)


def _ceil_div(a, b):
    return -(-a // b)


def _beta_loss_kernel(x_ref, xh_ref, mu_ref, lv_ref, out_ref, acc_ref, *,
                      beta, tile_rows, tiles_per_split, n_tiles, last_tile_rows):
    c = pl.program_id(0)           # split (core) index   -- "parallel"
    i = pl.program_id(1)           # tile index in split  -- "arbitrary" (reduction)
    t = c * tiles_per_split + i    # logical (unclamped) tile index
    last = n_tiles - 1
    tail_is_full = (last_tile_rows == tile_rows)   # static Python bool

    @pl.when(i == 0)
    def _init():
        acc_ref[...] = jnp.zeros_like(acc_ref)

    def bce(x, xh):
        # PyTorch's binary_cross_entropy clamps the log terms at -100.
        log_xh = jnp.maximum(jnp.log(xh), jnp.float32(-100.0))
        log_1m = jnp.maximum(jnp.log(1.0 - xh), jnp.float32(-100.0))
        # -(x*log_xh + (1-x)*log_1m) refactored to drop one mul and one sub.
        return -(x * (log_xh - log_1m) + log_1m)

    def accumulate(vals):
        # Fold the (tile_rows, 128) tile into the small (8, 128) accumulator
        # with pure VPU vreg adds; the reshape only splits the sublane-aligned
        # leading dim, so it stays a view.
        if tile_rows % 8 == 0:
            acc_ref[...] += jnp.sum(vals.reshape(tile_rows // 8, 8, LANES), axis=0)
        else:  # tiny single-tile fallback (rows not a multiple of 8)
            acc_ref[0:1, :] += jnp.sum(vals, axis=0, keepdims=True)

    # Fast path: full (interior) tiles -- no iota, no select.
    full_cond = (t < n_tiles) if tail_is_full else (t < last)

    @pl.when(full_cond)
    def _full_tile():
        x = x_ref[...].astype(jnp.float32)
        xh = xh_ref[...].astype(jnp.float32)
        accumulate(bce(x, xh))

    # Boundary path: only the single genuinely-partial tail tile.  The number
    # of valid rows is a compile-time constant, so the mask is one sublane
    # iota + compare (no global index arithmetic -> no int32 overflow risk).
    if not tail_is_full:
        @pl.when(t == last)
        def _tail_tile():
            row = jax.lax.broadcasted_iota(jnp.int32, (tile_rows, LANES), 0)
            valid = row < last_tile_rows
            # x = x_hat = 1 contributes exactly zero BCE and is NaN-safe.
            one = jnp.float32(1.0)
            x = jnp.where(valid, x_ref[...].astype(jnp.float32), one)
            xh = jnp.where(valid, xh_ref[...].astype(jnp.float32), one)
            accumulate(bce(x, xh))

    # Dead (clamped-index) tiles of the last split (t > last): no compute.

    @pl.when(i == pl.num_programs(1) - 1)
    def _finalize():
        recon = jnp.sum(acc_ref[...])     # single small XLU reduce per split
        mu = mu_ref[...].astype(jnp.float32)
        lv = lv_ref[...].astype(jnp.float32)
        kl = -0.5 * jnp.sum(1.0 + lv - jnp.exp(lv) - mu * mu)
        # Only split 0 contributes the (tiny) latent term.
        val = recon + jnp.where(c == 0, jnp.float32(beta) * kl, jnp.float32(0.0))
        # Lane-dense (1, 8, 128) output slab per split; wrapper reads [c, 0, 0].
        out_ref[...] = jnp.full(out_ref.shape, val, dtype=jnp.float32)


def _to_lanes(a, pad_value):
    """Flatten (native dtype, no upcast) and view as (rows, 128).

    When numel % 128 == 0 (the common case) this is a free reshape -- no extra
    HBM pass; otherwise only the sub-128 tail is padded with a loss-neutral
    value.  # TODO(synk): if the producer's layout is not row-major contiguous,
    fuse the flatten upstream to avoid an XLA relayout copy."""
    flat = a.reshape(-1)
    n = int(flat.shape[0])
    padded = max(LANES, _ceil_div(n, LANES) * LANES)
    if padded != n:
        flat = jnp.pad(flat, (0, padded - n), constant_values=pad_value)
    return flat.reshape(-1, LANES)


def beta_loss(x, x_hat, media, log_var, *, beta: float):
    assert x.size == x_hat.size, "x and x_hat must have the same number of elements"
    assert media.size == log_var.size, "media and log_var must have the same number of elements"

    # Neutral pads: x = x_hat = 1 -> zero BCE; mu = log_var = 0 -> zero KL term.
    x2d = _to_lanes(x, 1.0)
    xh2d = _to_lanes(x_hat, 1.0)
    mu2d = _to_lanes(media, 0.0)
    lv2d = _to_lanes(log_var, 0.0)

    rows = x2d.shape[0]
    lat_rows = mu2d.shape[0]

    # Tile the reconstruction slab.
    tile_rows = rows if rows <= MAX_TILE_ROWS else MAX_TILE_ROWS
    n_tiles = _ceil_div(rows, tile_rows)
    last_tile_rows = rows - (n_tiles - 1) * tile_rows   # static valid-row count of tail tile

    num_splits = NUM_CORE_SPLITS if n_tiles >= NUM_CORE_SPLITS else 1
    tiles_per_split = _ceil_div(n_tiles, num_splits)
    last_block = n_tiles - 1

    def recon_map(c, i):
        # Clamp so dead iterations of the last split re-read a valid block;
        # the kernel skips compute for them (t > last).
        return (jnp.minimum(c * tiles_per_split + i, last_block), 0)

    kernel = functools.partial(
        _beta_loss_kernel, beta=float(beta), tile_rows=tile_rows,
        tiles_per_split=tiles_per_split, n_tiles=n_tiles,
        last_tile_rows=last_tile_rows)

    out = pl.pallas_call(
        kernel,
        out_shape=jax.ShapeDtypeStruct((num_splits, 8, LANES), jnp.float32),
        grid_spec=pltpu.PrefetchScalarGridSpec(
            num_scalar_prefetch=0,
            grid=(num_splits, tiles_per_split),
            in_specs=[
                pl.BlockSpec((tile_rows, LANES), recon_map),
                pl.BlockSpec((tile_rows, LANES), recon_map),
                pl.BlockSpec((lat_rows, LANES), lambda c, i: (0, 0)),  # resident, tiny
                pl.BlockSpec((lat_rows, LANES), lambda c, i: (0, 0)),  # resident, tiny
            ],
            out_specs=pl.BlockSpec((1, 8, LANES), lambda c, i: (c, 0, 0)),
            scratch_shapes=[pltpu.VMEM((8, LANES), jnp.float32)],
        ),
        compiler_params=pltpu.CompilerParams(
            dimension_semantics=("parallel", "arbitrary"),
            vmem_limit_bytes=32 * 1024 * 1024,
        ),
    )(x2d, xh2d, mu2d, lv2d)

    # Combine per-split partial losses (split 0 already includes beta*KL).
    return jnp.sum(out[:, 0, 0])


def _reference(x, x_hat, media, log_var, beta):
    x = x.astype(jnp.float32)
    x_hat = x_hat.astype(jnp.float32)
    log_xh = jnp.maximum(jnp.log(x_hat), -100.0)
    log_1m = jnp.maximum(jnp.log(1.0 - x_hat), -100.0)
    recon = jnp.sum(-(x * log_xh + (1.0 - x) * log_1m))
    kl = -0.5 * jnp.sum(1.0 + log_var - jnp.exp(log_var) - media ** 2)
    return recon + beta * kl


if __name__ == "__main__":
    key = jax.random.PRNGKey(0)
    k1, k2, k3, k4 = jax.random.split(key, 4)

    B, C, H, W = 2, 4, 16, 16   # NCHW reconstruction tensors
    LATENT = 32

    x = jax.random.uniform(k1, (B, C, H, W), dtype=jnp.float32)           # targets in [0,1]
    x_hat = jax.random.uniform(k2, (B, C, H, W), dtype=jnp.float32,
                               minval=0.01, maxval=0.99)                   # probs in (0,1)
    media = jax.random.normal(k3, (B, LATENT), dtype=jnp.float32)          # latent means
    log_var = jax.random.normal(k4, (B, LATENT), dtype=jnp.float32)        # latent log-variances

    beta = 4.0

    out = beta_loss(x, x_hat, media, log_var, beta=beta)
    out = jax.block_until_ready(out)

    ref = _reference(x, x_hat, media, log_var, beta)
    assert jnp.allclose(out, ref, rtol=1e-5, atol=1e-3), (out, ref)

    print("KERNEL_OK")
</pallas_src>

<mosaic_0001>
module attributes {stable_mosaic.version = 11 : i64} {
  func.func @_beta_loss_kernel(%arg0: i32, %arg1: i32, %arg2: memref<16x128xf32, #tpu.memory_space<vmem>>, %arg3: memref<16x128xf32, #tpu.memory_space<vmem>>, %arg4: memref<1x128xf32, #tpu.memory_space<vmem>>, %arg5: memref<1x128xf32, #tpu.memory_space<vmem>>, %arg6: memref<1x8x128xf32, #tpu.memory_space<vmem>>, %arg7: memref<8x128xf32, #tpu.memory_space<vmem>>) attributes {dimension_semantics = [#tpu.dimension_semantics<parallel>, #tpu.dimension_semantics<arbitrary>], iteration_bounds = array<i64: 1, 1>, scalar_prefetch = 0 : i64, scratch_operands = 1 : i64, tpu.core_type = #tpu.core_type<tc>, window_params = [{transform_indices = @transform_0, window_bounds = array<i64: 16, 128>}, {transform_indices = @transform_1, window_bounds = array<i64: 16, 128>}, {pipeline_mode = #tpu.pipeline_mode<synchronous>, transform_indices = @transform_2, window_bounds = array<i64: 1, 128>}, {pipeline_mode = #tpu.pipeline_mode<synchronous>, transform_indices = @transform_3, window_bounds = array<i64: 1, 128>}, {transform_indices = @transform_4, window_bounds = array<i64: 1, 8, 128>}]} {
    %c1_i32 = arith.constant 1 : i32
    %0 = arith.muli %arg0, %c1_i32 : i32
    %1 = arith.addi %0, %arg1 : i32
    %c0_i32 = arith.constant 0 : i32
    %2 = arith.cmpi eq, %arg1, %c0_i32 : i32
    %3 = arith.extui %2 : i1 to i32
    %c0_i32_0 = arith.constant 0 : i32
    %4 = arith.cmpi ne, %3, %c0_i32_0 : i32
    scf.if %4 {
      %cst = arith.constant 0.000000e+00 : f32
      %11 = vector.broadcast %cst : f32 to vector<8x128xf32>
      %c0 = arith.constant 0 : index
      %c0_5 = arith.constant 0 : index
      %12 = vector.load %arg7[%c0, %c0_5] : memref<8x128xf32, #tpu.memory_space<vmem>>, vector<8x128xf32>
      tpu.vector_store %arg7[%c0, %c0_5], %11 {strides = array<i32>} : memref<8x128xf32, #tpu.memory_space<vmem>>, vector<8x128xf32>,
    } else {
    }
    %c1_i32_1 = arith.constant 1 : i32
    %5 = arith.cmpi slt, %1, %c1_i32_1 : i32
    %6 = arith.extui %5 : i1 to i32
    %c0_i32_2 = arith.constant 0 : i32
    %7 = arith.cmpi ne, %6, %c0_i32_2 : i32
    scf.if %7 {
      %c0 = arith.constant 0 : index
      %c0_5 = arith.constant 0 : index
      %11 = vector.load %arg2[%c0, %c0_5] : memref<16x128xf32, #tpu.memory_space<vmem>>, vector<16x128xf32>
      %c0_6 = arith.constant 0 : index
      %c0_7 = arith.constant 0 : index
      %12 = vector.load %arg3[%c0_6, %c0_7] : memref<16x128xf32, #tpu.memory_space<vmem>>, vector<16x128xf32>
      %13 = math.log %12 : vector<16x128xf32>
      %cst = arith.constant -1.000000e+02 : f32
      %14 = vector.broadcast %cst : f32 to vector<16x128xf32>
      %15 = arith.maximumf %13, %14 : vector<16x128xf32>
      %cst_8 = arith.constant 1.000000e+00 : f32
      %16 = vector.broadcast %cst_8 : f32 to vector<16x128xf32>
      %17 = arith.subf %16, %12 : vector<16x128xf32>
      %18 = math.log %17 : vector<16x128xf32>
      %cst_9 = arith.constant -1.000000e+02 : f32
      %19 = vector.broadcast %cst_9 : f32 to vector<16x128xf32>
      %20 = arith.maximumf %18, %19 : vector<16x128xf32>
      %21 = arith.subf %15, %20 : vector<16x128xf32>
      %22 = arith.mulf %11, %21 : vector<16x128xf32>
      %23 = arith.addf %22, %20 : vector<16x128xf32>
      %cst_10 = arith.constant 0.000000e+00 : f32
      %24 = vector.broadcast %cst_10 : f32 to vector<16x128xf32>
      %25 = arith.subf %24, %23 : vector<16x128xf32>
      %c0_11 = arith.constant 0 : index
      %c0_12 = arith.constant 0 : index
      %26 = vector.load %arg7[%c0_11, %c0_12] : memref<8x128xf32, #tpu.memory_space<vmem>>, vector<8x128xf32>
      %27 = vector.shape_cast %25 : vector<16x128xf32> to vector<2x8x128xf32>
      %cst_13 = arith.constant dense<0.000000e+00> : vector<8x128xf32>
      %28 = vector.multi_reduction <add>, %27, %cst_13 [0] : vector<2x8x128xf32> to vector<8x128xf32>
      %29 = arith.addf %26, %28 : vector<8x128xf32>
      %c0_14 = arith.constant 0 : index
      %c0_15 = arith.constant 0 : index
      %30 = vector.load %arg7[%c0_14, %c0_15] : memref<8x128xf32, #tpu.memory_space<vmem>>, vector<8x128xf32>
      tpu.vector_store %arg7[%c0_14, %c0_15], %29 {strides = array<i32>} : memref<8x128xf32, #tpu.memory_space<vmem>>, vector<8x128xf32>,
    } else {
    }
    %c0_i32_3 = arith.constant 0 : i32
    %8 = arith.cmpi eq, %arg1, %c0_i32_3 : i32
    %9 = arith.extui %8 : i1 to i32
    %c0_i32_4 = arith.constant 0 : i32
    %10 = arith.cmpi ne, %9, %c0_i32_4 : i32
    scf.if %10 {
      %c0 = arith.constant 0 : index
      %c0_5 = arith.constant 0 : index
      %11 = vector.load %arg7[%c0, %c0_5] : memref<8x128xf32, #tpu.memory_space<vmem>>, vector<8x128xf32>
      %12 = vector.shape_cast %11 : vector<8x128xf32> to vector<1x8x128xf32>
      %cst = arith.constant dense<0.000000e+00> : vector<1xf32>
      %13 = vector.multi_reduction <add>, %12, %cst [1, 2] : vector<1x8x128xf32> to vector<1xf32>
      %14 = vector.shape_cast %13 : vector<1xf32> to vector<1x1x1xf32>
      %15 = vector.extract %14[0, 0, 0] : f32 from vector<1x1x1xf32>
      %c0_6 = arith.constant 0 : index
      %c0_7 = arith.constant 0 : index
      %16 = vector.load %arg4[%c0_6, %c0_7] : memref<1x128xf32, #tpu.memory_space<vmem>>, vector<1x128xf32>
      %c0_8 = arith.constant 0 : index
      %c0_9 = arith.constant 0 : index
      %17 = vector.load %arg5[%c0_8, %c0_9] : memref<1x128xf32, #tpu.memory_space<vmem>>, vector<1x128xf32>
      %cst_10 = arith.constant 1.000000e+00 : f32
      %18 = vector.broadcast %cst_10 : f32 to vector<1x128xf32>
      %19 = arith.addf %18, %17 : vector<1x128xf32>
      %20 = math.exp %17 : vector<1x128xf32>
      %21 = arith.subf %19, %20 : vector<1x128xf32>
      %22 = arith.mulf %16, %16 : vector<1x128xf32>
      %23 = arith.subf %21, %22 : vector<1x128xf32>
      %24 = vector.shape_cast %23 : vector<1x128xf32> to vector<1x1x128xf32>
      %cst_11 = arith.constant dense<0.000000e+00> : vector<1xf32>
      %25 = vector.multi_reduction <add>, %24, %cst_11 [1, 2] : vector<1x1x128xf32> to vector<1xf32>
      %26 = vector.shape_cast %25 : vector<1xf32> to vector<1x1x1xf32>
      %27 = vector.extract %26[0, 0, 0] : f32 from vector<1x1x1xf32>
      %cst_12 = arith.constant -5.000000e-01 : f32
      %28 = arith.mulf %cst_12, %27 : f32
      %c0_i32_13 = arith.constant 0 : i32
      %29 = arith.cmpi eq, %arg0, %c0_i32_13 : i32
      %cst_14 = arith.constant 4.000000e+00 : f32
      %30 = arith.mulf %cst_14, %28 : f32
      %cst_15 = arith.constant 0.000000e+00 : f32
      %31 = arith.select %29, %30, %cst_15 : f32
      %32 = arith.addf %15, %31 : f32
      %33 = vector.broadcast %32 : f32 to vector<1x8x128xf32>
      %c0_16 = arith.constant 0 : index
      %c0_17 = arith.constant 0 : index
      %c0_18 = arith.constant 0 : index
      %34 = vector.load %arg6[%c0_16, %c0_17, %c0_18] : memref<1x8x128xf32, #tpu.memory_space<vmem>>, vector<1x8x128xf32>
      tpu.vector_store %arg6[%c0_16, %c0_17, %c0_18], %33 {strides = array<i32>} : memref<1x8x128xf32, #tpu.memory_space<vmem>>, vector<1x8x128xf32>,
    } else {
    }
    return
  }
  func.func @transform_0(%arg0: i32, %arg1: i32) -> (i32, i32) {
    %c1_i32 = arith.constant 1 : i32
    %0 = arith.muli %arg0, %c1_i32 : i32
    %1 = arith.addi %0, %arg1 : i32
    %c0_i32 = arith.constant 0 : i32
    %2 = arith.minsi %1, %c0_i32 : i32
    %c0_i32_0 = arith.constant 0 : i32
    %c0_i32_1 = arith.constant 0 : i32
    return %2, %c0_i32_0 : i32, i32
  }
  func.func @transform_1(%arg0: i32, %arg1: i32) -> (i32, i32) {
    %c1_i32 = arith.constant 1 : i32
    %0 = arith.muli %arg0, %c1_i32 : i32
    %1 = arith.addi %0, %arg1 : i32
    %c0_i32 = arith.constant 0 : i32
    %2 = arith.minsi %1, %c0_i32 : i32
    %c0_i32_0 = arith.constant 0 : i32
    %c0_i32_1 = arith.constant 0 : i32
    return %2, %c0_i32_0 : i32, i32
  }
  func.func @transform_2(%arg0: i32, %arg1: i32) -> (i32, i32) {
    %c0_i32 = arith.constant 0 : i32
    %c0_i32_0 = arith.constant 0 : i32
    %c0_i32_1 = arith.constant 0 : i32
    return %c0_i32, %c0_i32_0 : i32, i32
  }
  func.func @transform_3(%arg0: i32, %arg1: i32) -> (i32, i32) {
    %c0_i32 = arith.constant 0 : i32
    %c0_i32_0 = arith.constant 0 : i32
    %c0_i32_1 = arith.constant 0 : i32
    return %c0_i32, %c0_i32_0 : i32, i32
  }
  func.func @transform_4(%arg0: i32, %arg1: i32) -> (i32, i32, i32) {
    %c0_i32 = arith.constant 0 : i32
    %c0_i32_0 = arith.constant 0 : i32
    %c0_i32_1 = arith.constant 0 : i32
    return %arg0, %c0_i32, %c0_i32_0 : i32, i32, i32
  }
}

</mosaic_0001>

<llo_original>
// kernel: tpu_custom_call.1
$region0: #{tpu_custom_call.1}
  #allocation0 [shape = 'u32[]', space=smem, size = 0x4, offset = 0x4, fixed_abs, tag = 'smem constant byte address 0x4 - core index']
  #allocation1 [shape = 'u32[72,128]{1,0:T(1,128)}', space=vmem, size = 0x9000, scoped, tag = 'internal scratch']
  #allocation2 [shape = 'f32[8,128]{1,0:T(8,128)}', space=vmem, size = 0x1000, scoped, tag = 'scratch operand']
  %s0 = inlined_call_operand.hbm [shape: f32[16,128], index: 0, kind: input, shape index: {}]
  %s1 = inlined_call_operand.hbm [shape: f32[16,128], index: 1, kind: input, shape index: {}]
  %s2 = inlined_call_operand.vmem [shape: f32[1,128], index: 2, kind: input, shape index: {}]
  %s3 = inlined_call_operand.vmem [shape: f32[1,128], index: 3, kind: input, shape index: {}]
  %s4 = inlined_call_operand.hbm [shape: f32[1,8,128], index: 4, kind: output, shape index: {}]
  %s5 = sld [smem:[#allocation0]]
  $region46: #{tpu_custom_call.1} parent=0
    _
  %s7 = ssub.s32 1, %s5
  %s8 = scalar_select 0, %s7, %s5
  $region1: #{tpu_custom_call.1} parent=0
    #allocation3 [shape = 'u8[8192]{0}', space=vmem, size = 0x2000, scoped, tag = 'input window, operand 0, single buffered']
    #allocation4 [shape = 's32[1]{0}', space=sflag, size = 0x4, scoped, tag = 'scoped memory for tpu_custom_call.1']
    #allocation5 [shape = 's32[1]{0}', space=sflag, size = 0x4, scoped, tag = 'scoped memory for tpu_custom_call.1']
    #allocation6 [shape = 'u8[8192]{0}', space=vmem, size = 0x2000, scoped, tag = 'input window, operand 1, single buffered']
    #allocation7 [shape = 's32[1]{0}', space=sflag, size = 0x4, scoped, tag = 'scoped memory for tpu_custom_call.1']
    #allocation8 [shape = 'u8[4096]{0}', space=vmem, size = 0x1000, scoped, tag = 'output window, operand 0, single buffered']
    %9 = vsyncpa [#allocation4], 0
    %10 = vsyncpa [#allocation7], 0
    %11 = vsyncpa [#allocation5], 0
    // Predicated region
    $region2: #{tpu_custom_call.1} parent=1 // pred_check
      _
    $region3: #{tpu_custom_call.1} parent=1 // pred_check_branch
      %13 = sbr.rel (0) target = $region5
    $region4: #{tpu_custom_call.1} parent=1 // pred_region
      %s14 = sadd.s32 0, 0
      %p15 = scmp.lt.s32.totalorder %s14, 0
      %s16 = scalar_select %p15, %s14, 0
      %s17 = smul.u32 2, %s16
      %19 = vsyncadd [#allocation4], 0
      %s20 = smul.addr %s17, 8
      %s21 = scalar_lea.hbm %s0, %s20
      %s22 = sshll.u32 %s21, 4
      %s23 = int_to_ptr.hbm [resolvable:$true] %s22
      %s24 = sshll.u32 [#allocation3], 4
      %s25 = int_to_ptr.vmem [resolvable:$true] %s24
      %30 = dma.hbm_to_vmem [thread:$0]  %s23, 256, %s25, [#allocation4], 128, 128, 8
    $region5: #{tpu_custom_call.1} parent=1 // pred_fallthru
      _
    // Predicated region
    $region6: #{tpu_custom_call.1} parent=1 // pred_check
      _
    $region7: #{tpu_custom_call.1} parent=1 // pred_check_branch
      %32 = sbr.rel (0) target = $region9
    $region8: #{tpu_custom_call.1} parent=1 // pred_region
      %s33 = sadd.s32 0, 0
      %p34 = scmp.lt.s32.totalorder %s33, 0
      %s35 = scalar_select %p34, %s33, 0
      %s36 = smul.u32 2, %s35
      %38 = vsyncadd [#allocation7], 0
      %s39 = smul.addr %s36, 8
      %s40 = scalar_lea.hbm %s1, %s39
      %s41 = sshll.u32 %s40, 4
      %s42 = int_to_ptr.hbm [resolvable:$true] %s41
      %s43 = sshll.u32 [#allocation6], 4
      %s44 = int_to_ptr.vmem [resolvable:$true] %s43
      %49 = dma.hbm_to_vmem [thread:$0]  %s42, 256, %s44, [#allocation7], 128, 128, 8
    $region9: #{tpu_custom_call.1} parent=1 // pred_fallthru
      _
    // Predicated region
    $region10: #{tpu_custom_call.1} parent=1 // pred_check
      _
    $region11: #{tpu_custom_call.1} parent=1 // pred_check_branch
      %51 = sbr.rel (0) target = $region13
    $region12: #{tpu_custom_call.1} parent=1 // pred_region
      _
    $region13: #{tpu_custom_call.1} parent=1 // pred_fallthru
      _
    // Predicated region
    $region14: #{tpu_custom_call.1} parent=1 // pred_check
      _
    $region15: #{tpu_custom_call.1} parent=1 // pred_check_branch
      %53 = sbr.rel (0) target = $region17
    $region16: #{tpu_custom_call.1} parent=1 // pred_region
      _
    $region17: #{tpu_custom_call.1} parent=1 // pred_fallthru
      _
    // Predicated region
    $region18: #{tpu_custom_call.1} parent=1 // pred_check
      _
    $region19: #{tpu_custom_call.1} parent=1 // pred_check_branch
      %55 = sbr.rel (0) target = $region21
    $region20: #{tpu_custom_call.1} parent=1 // pred_region
      %57 = dma.done [#allocation4], 256
    $region21: #{tpu_custom_call.1} parent=1 // pred_fallthru
      _
    // Predicated region
    $region22: #{tpu_custom_call.1} parent=1 // pred_check
      _
    $region23: #{tpu_custom_call.1} parent=1 // pred_check_branch
      %59 = sbr.rel (0) target = $region25
    $region24: #{tpu_custom_call.1} parent=1 // pred_region
      %61 = dma.done [#allocation7], 256
    $region25: #{tpu_custom_call.1} parent=1 // pred_fallthru
      _
    %s62 = sadd.s32 0, 0
    %p63 = scmp.lt.s32.totalorder %s62, 0
    %s64 = scalar_select %p63, %s62, 0
    %s65 = smul.u32 2, %s64
    %s66 = sadd.s32 0, 0
    %p67 = scmp.lt.s32.totalorder %s66, 0
    %s68 = scalar_select %p67, %s66, 0
    %s69 = smul.u32 2, %s68
    %s70 = sadd.s32 0, 0
    %p71 = scmp.eq.s32.totalorder 0, 0
    // Predicated region
    $region26: #{tpu_custom_call.1} parent=1 // pred_check
      %p72 = pneg %p71
    $region27: #{tpu_custom_call.1} parent=1 // pred_check_branch
      %74 = sbr.rel (%p72) target = $region29
    $region28: #{tpu_custom_call.1} parent=1 // pred_region
      %75 = vst [vmem:[#allocation2] sm:$0xff] 0.0
    $region29: #{tpu_custom_call.1} parent=1 // pred_fallthru
      _
    %p76 = scmp.lt.s32.totalorder %s70, 1
    // Predicated region
    $region30: #{tpu_custom_call.1} parent=1 // pred_check
      %p77 = pneg %p76
    $region31: #{tpu_custom_call.1} parent=1 // pred_check_branch
      %79 = sbr.rel (%p77) target = $region33
    $region32: #{tpu_custom_call.1} parent=1 // pred_region
      %v80 = vld [vmem:[#allocation3] sm:$0xff]
      %v81 = vld [vmem:[#allocation3 + $0x8] sm:$0xff]
      %v82 = vld [vmem:[#allocation6] sm:$0xff]
      %v83 = vld [vmem:[#allocation6 + $0x8] sm:$0xff]
      %v84 = vlog2.pop %v82
      %v85 = vmul.f32 %v84, 0.6931472
      %v86 = vlog2.pop %v83
      %v87 = vmul.f32 %v86, 0.6931472
      %v88 = vmax.f32 %v85, -100.0
      %v89 = vmax.f32 %v87, -100.0
      %v90 = vsub.f32 1.0, %v82
      %v91 = vsub.f32 1.0, %v83
      %v92 = vlog2.pop %v90
      %v93 = vmul.f32 %v92, 0.6931472
      %v94 = vlog2.pop %v91
      %v95 = vmul.f32 %v94, 0.6931472
      %v96 = vmax.f32 %v93, -100.0
      %v97 = vmax.f32 %v95, -100.0
      %v98 = vsub.f32 %v88, %v96
      %v99 = vsub.f32 %v89, %v97
      %v100 = vmul.f32 %v80, %v98
      %v101 = vmul.f32 %v81, %v99
      %v102 = vadd.f32 %v100, %v96
      %v103 = vadd.f32 %v101, %v97
      %v104 = vsub.f32 0.0, %v102
      %v105 = vsub.f32 0.0, %v103
      %v106 = vld [vmem:[#allocation2] sm:$0xff]
      %v107 = vadd.f32 %v104, %v105
      %v108 = vadd.f32 %v106, %v107
      %109 = vst [vmem:[#allocation2] sm:$0xff] %v108
    $region33: #{tpu_custom_call.1} parent=1 // pred_fallthru
      _
    // Predicated region
    $region34: #{tpu_custom_call.1} parent=1 // pred_check
      %p110 = pneg %p71
    $region35: #{tpu_custom_call.1} parent=1 // pred_check_branch
      %112 = sbr.rel (%p110) target = $region37
    $region36: #{tpu_custom_call.1} parent=1 // pred_region
      %v113 = vld [vmem:[#allocation2] sm:$0xff]
      %114 = vadd.xlane.f32.xlu0 %v113
      %v115 = vpop.xlane.xlu0 %114
      %v116 = vrot.slane %v115, 4
      %v117 = vadd.f32 %v115, %v116
      %v118 = vrot.slane %v117, 2
      %v119 = vadd.f32 %v117, %v118
      %v120 = vrot.slane %v119, 1
      %v121 = vadd.f32 %v119, %v120
      %s122 = vtos %v121
      %v123 = vld [vmem:[%s2] sm:$0x1]
      %v124 = vld [vmem:[%s3] sm:$0x1]
      %v125 = vadd.f32 %v124, 1.0
      %v126 = vmul.f32 %v124, 1.442695
      %v127 = vpow.pop %v126
      %v128 = vsub.f32 %v125, %v127
      %v129 = vmul.f32 %v123, %v123
      %v130 = vsub.f32 %v128, %v129
      %vm131 = vcmask 1040384
      %v132 = vsel %vm131, %v130, 0.0
      %133 = vadd.xlane.f32.xlu0 %v132
      %v134 = vpop.xlane.xlu0 %133
      %v135 = vrot.slane %v134, 4
      %v136 = vadd.f32 %v134, %v135
      %v137 = vrot.slane %v136, 2
      %v138 = vadd.f32 %v136, %v137
      %v139 = vrot.slane %v138, 1
      %v140 = vadd.f32 %v138, %v139
      %s141 = vtos %v140
      %s142 = smul.f32 %s141, -0.5
      %p143 = scmp.eq.s32.totalorder 0, 0
      %s144 = smul.f32 %s142, 4.0
      %s145 = scalar_select %p143, %s144, 0.0
      %s146 = sadd.f32 %s122, %s145
      %v147 = vstv %s146
      %148 = vst [vmem:[#allocation8] sm:$0xff] %v147
    $region37: #{tpu_custom_call.1} parent=1 // pred_fallthru
      _
    // Predicated region
    $region38: #{tpu_custom_call.1} parent=1 // pred_check
      _
    $region39: #{tpu_custom_call.1} parent=1 // pred_check_branch
      %150 = sbr.rel (0) target = $region41
    $region40: #{tpu_custom_call.1} parent=1 // pred_region
      %152 = vsyncadd [#allocation5], 0
      %s154 = sshll.u32 [#allocation8], 4
      %s155 = int_to_ptr.vmem [resolvable:$true] %s154
      %s156 = sshll.u32 %s4, 4
      %s157 = int_to_ptr.hbm [resolvable:$true] %s156
      %159 = dma.vmem_to_hbm [thread:$0]  %s155, 128, %s157, [#allocation5]
    $region41: #{tpu_custom_call.1} parent=1 // pred_fallthru
      _
    // Predicated region
    $region42: #{tpu_custom_call.1} parent=1 // pred_check
      _
    $region43: #{tpu_custom_call.1} parent=1 // pred_check_branch
      %161 = sbr.rel (0) target = $region45
    $region44: #{tpu_custom_call.1} parent=1 // pred_region
      %163 = dma.done [#allocation5], 128
    $region45: #{tpu_custom_call.1} parent=1 // pred_fallthru
      _
    %164 = vsyncpa [#allocation4], 1
    %165 = vsyncpa [#allocation7], 1
    %166 = vsyncpa [#allocation5], 1

</llo_original>
